<compile_context>
chip_gen: v7x
topology: tpu7x:2x2x1
jax: 0.10.0
libtpu: 0.0.40
codegen_flags: <defaults>
</compile_context>

<pallas_src>
import jax
import jax.numpy as jnp
from jax.experimental import pallas as pl
from jax.experimental.pallas import tpu as pltpu


# --------------------------------------------------------------------------
# Kernels
# --------------------------------------------------------------------------
def _so2_embed_kernel(x_ref, cos_ref, nsin_ref):
    # Lane-dense (tile, 128) block: cos / -sin, elementwise (EUP).
    x = x_ref[...]
    cos_ref[...] = jnp.cos(x)
    nsin_ref[...] = -jnp.sin(x)


def _l2_normalize_kernel(x_ref, o_ref):
    # Row-wise L2 normalize, matching torch.nn.functional.normalize:
    #   x / clamp_min(||x||_2, eps),  eps = 1e-30
    x = x_ref[...].astype(jnp.float32)
    norm = jnp.sqrt(jnp.sum(x * x, axis=-1, keepdims=True))
    denom = jnp.maximum(norm, jnp.float32(1e-30))
    o_ref[...] = (x / denom).astype(o_ref.dtype)


# --------------------------------------------------------------------------
# Wrappers
# --------------------------------------------------------------------------
def _round_up(x: int, m: int) -> int:
    return ((x + m - 1) // m) * m


def _so2_embed(angles: jax.Array) -> jax.Array:
    """d == 1 branch: (n, 1) -> (n, 2) = [cos(a), -sin(a)]."""
    n = angles.shape[0]
    dtype = angles.dtype

    flat = angles.reshape(-1)                       # (n,)
    # Pad flat length up to full (8, 128) vregs -> lane-dense slab.
    len_pad = _round_up(max(n, 1), 8 * 128)
    rows = len_pad // 128
    row_tile = 512
    if rows > row_tile:
        rows = _round_up(rows, row_tile)
        len_pad = rows * 128
        tile = row_tile
    else:
        tile = rows
    if len_pad != n:
        flat = jnp.pad(flat, (0, len_pad - n))
    slab = flat.reshape(rows, 128)

    blk = pl.BlockSpec((tile, 128), lambda i: (i, 0))
    cos_s, nsin_s = pl.pallas_call(
        _so2_embed_kernel,
        out_shape=(
            jax.ShapeDtypeStruct((rows, 128), dtype),
            jax.ShapeDtypeStruct((rows, 128), dtype),
        ),
        grid=(rows // tile,),
        in_specs=[blk],
        out_specs=(blk, blk),
        compiler_params=pltpu.CompilerParams(
            dimension_semantics=("parallel",)
        ),
    )(slab)

    cos_v = cos_s.reshape(-1)[:n]
    nsin_v = nsin_s.reshape(-1)[:n]
    return jnp.stack([cos_v, nsin_v], axis=1)       # (n, 2)


def _pick_row_tile(d: int, itemsize: int, max_block_bytes: int = 1 << 21) -> int:
    # Keep each (tile, d) block at ~<=2 MiB so in+out double-buffers fit the
    # default scoped-VMEM limit on v5e/v6e/v7x.
    t = max_block_bytes // max(d * itemsize, 1)
    t = max(8, (t // 8) * 8)
    return min(t, 1024)


def _l2_normalize(angles: jax.Array) -> jax.Array:
    """d > 1 branch: row-wise L2 normalization with eps=1e-30."""
    n, d = angles.shape
    itemsize = jnp.dtype(angles.dtype).itemsize

    tile = _pick_row_tile(d, itemsize)
    n_pad = _round_up(n, 8)
    if n_pad > tile:
        n_pad = _round_up(n_pad, tile)
    else:
        tile = n_pad

    x = angles
    if n_pad != n:
        x = jnp.pad(angles, ((0, n_pad - n), (0, 0)))   # zero rows: safe

    blk = pl.BlockSpec((tile, d), lambda i: (i, 0))
    out = pl.pallas_call(
        _l2_normalize_kernel,
        out_shape=jax.ShapeDtypeStruct((n_pad, d), angles.dtype),
        grid=(n_pad // tile,),
        in_specs=[blk],
        out_specs=blk,
        compiler_params=pltpu.CompilerParams(
            dimension_semantics=("parallel",)
        ),
    )(x)

    return out[:n] if n_pad != n else out


def action_net_so2_forward(angles: jax.Array) -> jax.Array:
    """Forward pass of ActionNetSo2 (branch on static last dim)."""
    assert angles.ndim == 2, "ActionNetSo2 expects (n, d) input"
    _, d = angles.shape
    if d == 1:
        return _so2_embed(angles)
    return _l2_normalize(angles)


# --------------------------------------------------------------------------
# Self-test
# --------------------------------------------------------------------------
if __name__ == "__main__":
    key = jax.random.PRNGKey(0)
    k1, k2 = jax.random.split(key)

    # Branch 1: d == 1  ->  (n, 2) = [cos, -sin]
    ang1 = jax.random.normal(k1, (8, 1), dtype=jnp.float32)
    y1 = jax.block_until_ready(action_net_so2_forward(ang1))
    ref1 = jnp.concatenate([jnp.cos(ang1), -jnp.sin(ang1)], axis=1)
    assert y1.shape == (8, 2) and y1.dtype == ang1.dtype
    assert bool(jnp.allclose(y1, ref1, rtol=1e-5, atol=1e-6))

    # Branch 2: d > 1  ->  L2-normalized rows
    ang2 = jax.random.normal(k2, (8, 32), dtype=jnp.float32)
    y2 = jax.block_until_ready(action_net_so2_forward(ang2))
    norm = jnp.sqrt(jnp.sum(ang2 * ang2, axis=1, keepdims=True))
    ref2 = ang2 / jnp.maximum(norm, 1e-30)
    assert y2.shape == ang2.shape and y2.dtype == ang2.dtype
    assert bool(jnp.allclose(y2, ref2, rtol=1e-5, atol=1e-6))

    print("KERNEL_OK")
</pallas_src>

<mosaic_0001>
module attributes {stable_mosaic.version = 11 : i64} {
  func.func @_so2_embed_kernel(%arg0: i32, %arg1: memref<8x128xf32, #tpu.memory_space<vmem>>, %arg2: memref<8x128xf32, #tpu.memory_space<vmem>>, %arg3: memref<8x128xf32, #tpu.memory_space<vmem>>) attributes {dimension_semantics = [#tpu.dimension_semantics<parallel>], iteration_bounds = array<i64: 1>, scalar_prefetch = 0 : i64, scratch_operands = 0 : i64, tpu.core_type = #tpu.core_type<tc>, window_params = [{transform_indices = @transform_0, window_bounds = array<i64: 8, 128>}, {transform_indices = @transform_1, window_bounds = array<i64: 8, 128>}, {transform_indices = @transform_2, window_bounds = array<i64: 8, 128>}]} {
    %c0 = arith.constant 0 : index
    %c0_0 = arith.constant 0 : index
    %0 = vector.load %arg1[%c0, %c0_0] : memref<8x128xf32, #tpu.memory_space<vmem>>, vector<8x128xf32>
    %1 = math.cos %0 : vector<8x128xf32>
    %c0_1 = arith.constant 0 : index
    %c0_2 = arith.constant 0 : index
    %2 = vector.load %arg2[%c0_1, %c0_2] : memref<8x128xf32, #tpu.memory_space<vmem>>, vector<8x128xf32>
    tpu.vector_store %arg2[%c0_1, %c0_2], %1 {strides = array<i32>} : memref<8x128xf32, #tpu.memory_space<vmem>>, vector<8x128xf32>,
    %3 = math.sin %0 : vector<8x128xf32>
    %cst = arith.constant 0.000000e+00 : f32
    %4 = vector.broadcast %cst : f32 to vector<8x128xf32>
    %5 = arith.subf %4, %3 : vector<8x128xf32>
    %c0_3 = arith.constant 0 : index
    %c0_4 = arith.constant 0 : index
    %6 = vector.load %arg3[%c0_3, %c0_4] : memref<8x128xf32, #tpu.memory_space<vmem>>, vector<8x128xf32>
    tpu.vector_store %arg3[%c0_3, %c0_4], %5 {strides = array<i32>} : memref<8x128xf32, #tpu.memory_space<vmem>>, vector<8x128xf32>,
    return
  }
  func.func @transform_0(%arg0: i32) -> (i32, i32) {
    %c0_i32 = arith.constant 0 : i32
    %c0_i32_0 = arith.constant 0 : i32
    return %arg0, %c0_i32 : i32, i32
  }
  func.func @transform_1(%arg0: i32) -> (i32, i32) {
    %c0_i32 = arith.constant 0 : i32
    %c0_i32_0 = arith.constant 0 : i32
    return %arg0, %c0_i32 : i32, i32
  }
  func.func @transform_2(%arg0: i32) -> (i32, i32) {
    %c0_i32 = arith.constant 0 : i32
    %c0_i32_0 = arith.constant 0 : i32
    return %arg0, %c0_i32 : i32, i32
  }
}

</mosaic_0001>

<llo_original>
// kernel: tpu_custom_call.1
$region0: #{tpu_custom_call.1}
  #allocation0 [shape = 'u32[]', space=smem, size = 0x4, offset = 0x4, fixed_abs, tag = 'smem constant byte address 0x4 - core index']
  #allocation1 [shape = 'u32[144,128]{1,0:T(1,128)}', space=vmem, size = 0x12000, scoped, tag = 'internal scratch']
  %s0 = inlined_call_operand.hbm [shape: f32[8,128], index: 0, kind: input, shape index: {}]
  %s1 = inlined_call_operand.hbm [shape: f32[8,128], index: 1, kind: output, shape index: {0}]
  %s2 = inlined_call_operand.hbm [shape: f32[8,128], index: 2, kind: output, shape index: {1}]
  %3 = xla_tuple %s1, %s2
  %s4 = sld [smem:[#allocation0]]
  $region26: #{tpu_custom_call.1} parent=0
    _
  %s6 = ssub.s32 1, %s4
  %s7 = scalar_select 0, %s6, %s4
  $region1: #{tpu_custom_call.1} parent=0
    #allocation2 [shape = 'u8[4096]{0}', space=vmem, size = 0x1000, scoped, tag = 'input window, operand 0, single buffered']
    #allocation3 [shape = 's32[1]{0}', space=sflag, size = 0x4, scoped, tag = 'scoped memory for tpu_custom_call.1']
    #allocation4 [shape = 's32[1]{0}', space=sflag, size = 0x4, scoped, tag = 'scoped memory for tpu_custom_call.1']
    #allocation5 [shape = 'u8[4096]{0}', space=vmem, size = 0x1000, scoped, tag = 'output window, operand 0, single buffered']
    #allocation6 [shape = 'u8[4096]{0}', space=vmem, size = 0x1000, scoped, tag = 'output window, operand 1, single buffered']
    #allocation7 [shape = 's32[1]{0}', space=sflag, size = 0x4, scoped, tag = 'scoped memory for tpu_custom_call.1']
    %8 = vsyncpa [#allocation3], 0
    %9 = vsyncpa [#allocation4], 0
    %10 = vsyncpa [#allocation7], 0
    // Predicated region
    $region2: #{tpu_custom_call.1} parent=1 // pred_check
      _
    $region3: #{tpu_custom_call.1} parent=1 // pred_check_branch
      %12 = sbr.rel (0) target = $region5
    $region4: #{tpu_custom_call.1} parent=1 // pred_region
      %s14 = ssub.s32 128, 128
      %15 = vsyncadd [#allocation3], %s14
      %s17 = sshll.u32 [#allocation2], 4
      %s18 = int_to_ptr.vmem [resolvable:$true] %s17
      %20 = dma.hbm_to_vmem [thread:$0]  %s0, 128, %s18, [#allocation3]
    $region5: #{tpu_custom_call.1} parent=1 // pred_fallthru
      _
    // Predicated region
    $region6: #{tpu_custom_call.1} parent=1 // pred_check
      _
    $region7: #{tpu_custom_call.1} parent=1 // pred_check_branch
      %22 = sbr.rel (0) target = $region9
    $region8: #{tpu_custom_call.1} parent=1 // pred_region
      %23 = dma.done [#allocation3], 128
    $region9: #{tpu_custom_call.1} parent=1 // pred_fallthru
      _
    %v24 = vld [vmem:[#allocation2] sm:$0xff]
    %v25 = vand.u32 2147483647, %v24
    %vm26 = vcmp.le.f32.partialorder %v25, 0.7853982
    %vm27 = vcmp.lt.s32.totalorder %v24, 0
    %v28 = vand.u32 %v24, 2139095040
    %v29 = vshrl.u32 %v28, 23
    %v30 = vsub.s32 %v29, 127
    %v31 = vand.u32 2147483647, %v24
    %v32 = vand.u32 %v31, 8388607
    %v33 = vor.u32 %v32, 8388608
    %v34 = vsub.s32 0, %v33
    %v35 = vadd.s32 %v30, 1
    %vm36 = vcmp.gt.s32.totalorder %v35, 0
    %v37 = vsel %vm36, %v35, 0
    %v38 = vshrl.u32 %v37, 5
    %v39 = vand.u32 %v37, 31
    %v40 = vsub.s32 32, %v39
    %v41 = vshrl.u32 683565275, %v40
    %v42 = vshll.u32 683565275, %v39
    %v43 = vshrl.u32 2475754826, %v40
    %v44 = vor.u32 %v42, %v43
    %v45 = vshll.u32 2475754826, %v39
    %v46 = vshrl.u32 2131351028, %v40
    %v47 = vor.u32 %v45, %v46
    %v48 = vshll.u32 2131351028, %v39
    %v49 = vshrl.u32 2102212464, %v40
    %v50 = vor.u32 %v48, %v49
    %v51 = vshll.u32 2102212464, %v39
    %v52 = vshrl.u32 920167782, %v40
    %v53 = vor.u32 %v51, %v52
    %v54 = vshll.u32 920167782, %v39
    %v55 = vshrl.u32 1326507024, %v40
    %v56 = vor.u32 %v54, %v55
    %vm57 = vcmp.lt.s32.totalorder %v38, 1
    %vm58 = vcmp.lt.s32.totalorder %v38, 2
    %vm59 = vcmp.lt.s32.totalorder %v38, 3
    %vm60 = vcmp.lt.s32.totalorder %v38, 4
    %v61 = vsel %vm57, %v41, %v44
    %v62 = vsel %vm60, %v50, 2102212464
    %v63 = vsel %vm59, %v47, %v62
    %v64 = vsel %vm58, %v61, %v63
    %v65 = vsel %vm57, %v44, %v47
    %v66 = vsel %vm60, %v53, 920167782
    %v67 = vsel %vm59, %v50, %v66
    %v68 = vsel %vm58, %v65, %v67
    %v69 = vsel %vm57, %v47, %v50
    %v70 = vsel %vm60, %v56, 1326507024
    %v71 = vsel %vm59, %v53, %v70
    %v72 = vsel %vm58, %v69, %v71
    %v73 = vshll.u32 %v33, 8
    %v74 = vmul.u32.u64.compose %v73, %v72
    %v75 = vextract.low.u32 %v74
    %v76 = vextract.high.u32 %v74
    %v77 = vmul.u32.u64.compose %v73, %v68
    %v78 = vextract.low.u32 %v77
    %v79 = vextract.high.u32 %v77
    %v80 = vmul.u32 %v73, %v64
    %v81 = vadd.s32 %v76, %v78
    %vm82 = vc.u32 %v76, %v78
    %v83 = vadd.s32 %v79, 1
    %v84 = vsel %vm82, %v83, %v79
    %v85 = vadd.s32 %v80, %v84
    %v86 = vadd.s32 %v85, 536870912
    %v87 = vshrl.u32 %v86, 30
    %v88 = vshll.u32 %v87, 30
    %v89 = vsub.s32 %v85, %v88
    %vm90 = vcmp.lt.s32.totalorder %v89, 0
    %v91 = vsub.s32 0, %v89
    %v92 = vsel %vm90, %v91, %v89
    %v93 = vclz %v92
    %v94 = vsub.s32 %v93, 2
    %vm95 = vcmp.gt.s32.totalorder 0, %v94
    %v96 = vsel %vm95, 0, %v94
    %v97 = vsub.s32 32, %v96
    %v98 = vshll.u32 %v89, %v96
    %v99 = vshrl.u32 %v81, %v97
    %v100 = vor.u32 %v98, %v99
    %v101 = vsub.s32 4294967266, %v96
    %v102 = vadd.s32 %v101, 127
    %v103 = vshll.u32 %v102, 23
    %v104 = vor.u32 4788187, %v103
    %v105 = vand.u32 2147483647, %v104
    %v107 = vcvt.s32.f32 %v100
    %v108 = vmul.f32 %v107, %v105
    %v109 = vxor.u32 %v108, 2147483648
    %v110 = vsel %vm27, %v109, %v108
    %v111 = vsub.s32 4, %v87
    %v112 = vsel %vm27, %v111, %v87
    %v113 = vsel %vm26, %v24, %v110
    %v114 = vsel %vm26, 0, %v112
    %v115 = vcosq.f32.pop %v113
    %v116 = vsinq.f32.pop %v113
    %vm117 = vweird.f32 %v24
    %v118 = vand.u32 %v114, 3
    %vm119 = vcmp.lt.s32.totalorder %v118, 2
    %vm120 = vcmp.eq.s32.totalorder %v118, 0
    %v121 = vxor.u32 %v116, 2147483648
    %v122 = vsel %vm120, %v115, %v121
    %vm123 = vcmp.eq.s32.totalorder %v118, 2
    %v124 = vxor.u32 %v115, 2147483648
    %v125 = vsel %vm123, %v124, %v116
    %v126 = vsel %vm119, %v122, %v125
    %v127 = vsel %vm117, nan, %v126
    %128 = vst [vmem:[#allocation5] sm:$0xff] %v127
    %v129 = vand.u32 2147483647, %v24
    %vm130 = vcmp.le.f32.partialorder %v129, 0.7853982
    %vm131 = vcmp.lt.s32.totalorder %v24, 0
    %v132 = vand.u32 %v24, 2139095040
    %v133 = vshrl.u32 %v132, 23
    %v134 = vsub.s32 %v133, 127
    %v135 = vand.u32 2147483647, %v24
    %v136 = vand.u32 %v135, 8388607
    %v137 = vor.u32 %v136, 8388608
    %v138 = vsub.s32 0, %v137
    %v139 = vadd.s32 %v134, 1
    %vm140 = vcmp.gt.s32.totalorder %v139, 0
    %v141 = vsel %vm140, %v139, 0
    %v142 = vshrl.u32 %v141, 5
    %v143 = vand.u32 %v141, 31
    %v144 = vsub.s32 32, %v143
    %v145 = vshrl.u32 683565275, %v144
    %v146 = vshll.u32 683565275, %v143
    %v147 = vshrl.u32 2475754826, %v144
    %v148 = vor.u32 %v146, %v147
    %v149 = vshll.u32 2475754826, %v143
    %v150 = vshrl.u32 2131351028, %v144
    %v151 = vor.u32 %v149, %v150
    %v152 = vshll.u32 2131351028, %v143
    %v153 = vshrl.u32 2102212464, %v144
    %v154 = vor.u32 %v152, %v153
    %v155 = vshll.u32 2102212464, %v143
    %v156 = vshrl.u32 920167782, %v144
    %v157 = vor.u32 %v155, %v156
    %v158 = vshll.u32 920167782, %v143
    %v159 = vshrl.u32 1326507024, %v144
    %v160 = vor.u32 %v158, %v159
    %vm161 = vcmp.lt.s32.totalorder %v142, 1
    %vm162 = vcmp.lt.s32.totalorder %v142, 2
    %vm163 = vcmp.lt.s32.totalorder %v142, 3
    %vm164 = vcmp.lt.s32.totalorder %v142, 4
    %v165 = vsel %vm161, %v145, %v148
    %v166 = vsel %vm164, %v154, 2102212464
    %v167 = vsel %vm163, %v151, %v166
    %v168 = vsel %vm162, %v165, %v167
    %v169 = vsel %vm161, %v148, %v151
    %v170 = vsel %vm164, %v157, 920167782
    %v171 = vsel %vm163, %v154, %v170
    %v172 = vsel %vm162, %v169, %v171
    %v173 = vsel %vm161, %v151, %v154
    %v174 = vsel %vm164, %v160, 1326507024
    %v175 = vsel %vm163, %v157, %v174
    %v176 = vsel %vm162, %v173, %v175
    %v177 = vshll.u32 %v137, 8
    %v178 = vmul.u32.u64.compose %v177, %v176
    %v179 = vextract.low.u32 %v178
    %v180 = vextract.high.u32 %v178
    %v181 = vmul.u32.u64.compose %v177, %v172
    %v182 = vextract.low.u32 %v181
    %v183 = vextract.high.u32 %v181
    %v184 = vmul.u32 %v177, %v168
    %v185 = vadd.s32 %v180, %v182
    %vm186 = vc.u32 %v180, %v182
    %v187 = vadd.s32 %v183, 1
    %v188 = vsel %vm186, %v187, %v183
    %v189 = vadd.s32 %v184, %v188
    %v190 = vadd.s32 %v189, 536870912
    %v191 = vshrl.u32 %v190, 30
    %v192 = vshll.u32 %v191, 30
    %v193 = vsub.s32 %v189, %v192
    %vm194 = vcmp.lt.s32.totalorder %v193, 0
    %v195 = vsub.s32 0, %v193
    %v196 = vsel %vm194, %v195, %v193
    %v197 = vclz %v196
    %v198 = vsub.s32 %v197, 2
    %vm199 = vcmp.gt.s32.totalorder 0, %v198
    %v200 = vsel %vm199, 0, %v198
    %v201 = vsub.s32 32, %v200
    %v202 = vshll.u32 %v193, %v200
    %v203 = vshrl.u32 %v185, %v201
    %v204 = vor.u32 %v202, %v203
    %v205 = vsub.s32 4294967266, %v200
    %v206 = vadd.s32 %v205, 127
    %v207 = vshll.u32 %v206, 23
    %v208 = vor.u32 4788187, %v207
    %v209 = vand.u32 2147483647, %v208
    %v211 = vcvt.s32.f32 %v204
    %v212 = vmul.f32 %v211, %v209
    %v213 = vxor.u32 %v212, 2147483648
    %v214 = vsel %vm131, %v213, %v212
    %v215 = vsub.s32 4, %v191
    %v216 = vsel %vm131, %v215, %v191
    %v217 = vsel %vm130, %v24, %v214
    %v218 = vsel %vm130, 0, %v216
    %v219 = vcosq.f32.pop %v217
    %v220 = vsinq.f32.pop %v217
    %vm221 = vweird.f32 %v24
    %v222 = vadd.s32 %v218, 3
    %v223 = vand.u32 %v222, 3
    %vm224 = vcmp.lt.s32.totalorder %v223, 2
    %vm225 = vcmp.eq.s32.totalorder %v223, 0
    %v226 = vxor.u32 %v220, 2147483648
    %v227 = vsel %vm225, %v219, %v226
    %vm228 = vcmp.eq.s32.totalorder %v223, 2
    %v229 = vxor.u32 %v219, 2147483648
    %v230 = vsel %vm228, %v229, %v220
    %v231 = vsel %vm224, %v227, %v230
    %v232 = vsel %vm221, nan, %v231
    %v233 = vsub.f32 0.0, %v232
    %234 = vst [vmem:[#allocation6] sm:$0xff] %v233
    // Predicated region
    $region10: #{tpu_custom_call.1} parent=1 // pred_check
      _
    $region11: #{tpu_custom_call.1} parent=1 // pred_check_branch
      %236 = sbr.rel (0) target = $region13
    $region12: #{tpu_custom_call.1} parent=1 // pred_region
      %s238 = ssub.s32 128, 128
      %239 = vsyncadd [#allocation4], %s238
      %s241 = sshll.u32 [#allocation5], 4
      %s242 = int_to_ptr.vmem [resolvable:$true] %s241
      %244 = dma.vmem_to_hbm [thread:$0]  %s242, 128, %s1, [#allocation4]
    $region13: #{tpu_custom_call.1} parent=1 // pred_fallthru
      _
    // Predicated region
    $region14: #{tpu_custom_call.1} parent=1 // pred_check
      _
    $region15: #{tpu_custom_call.1} parent=1 // pred_check_branch
      %246 = sbr.rel (0) target = $region17
    $region16: #{tpu_custom_call.1} parent=1 // pred_region
      %s248 = ssub.s32 128, 128
      %249 = vsyncadd [#allocation7], %s248
      %s251 = sshll.u32 [#allocation6], 4
      %s252 = int_to_ptr.vmem [resolvable:$true] %s251
      %254 = dma.vmem_to_hbm [thread:$0]  %s252, 128, %s2, [#allocation7]
    $region17: #{tpu_custom_call.1} parent=1 // pred_fallthru
      _
    // Predicated region
    $region18: #{tpu_custom_call.1} parent=1 // pred_check
      _
    $region19: #{tpu_custom_call.1} parent=1 // pred_check_branch
      %256 = sbr.rel (0) target = $region21
    $region20: #{tpu_custom_call.1} parent=1 // pred_region
      %257 = dma.done [#allocation4], 128
    $region21: #{tpu_custom_call.1} parent=1 // pred_fallthru
      _
    // Predicated region
    $region22: #{tpu_custom_call.1} parent=1 // pred_check
      _
    $region23: #{tpu_custom_call.1} parent=1 // pred_check_branch
      %259 = sbr.rel (0) target = $region25
    $region24: #{tpu_custom_call.1} parent=1 // pred_region
      %260 = dma.done [#allocation7], 128
    $region25: #{tpu_custom_call.1} parent=1 // pred_fallthru
      _
    %261 = vsyncpa [#allocation3], 1
    %262 = vsyncpa [#allocation4], 1
    %263 = vsyncpa [#allocation7], 1

</llo_original>
